<compile_context>
chip_gen: v5e
topology: v5e:2x2
jax: 0.10.0
libtpu: 0.0.40
codegen_flags: <defaults>
</compile_context>

<pallas_src>
import functools

import jax
import jax.numpy as jnp
from jax import lax
from jax.experimental import pallas as pl
from jax.experimental.pallas import tpu as pltpu


# --------------------------------------------------------------------------- #
# helpers
# --------------------------------------------------------------------------- #
def _round_up(x: int, m: int) -> int:
    return ((x + m - 1) // m) * m


def _sublane_multiple(dtype) -> int:
    # packing factor along sublanes: f32 -> 8, bf16 -> 16, int8/fp8 -> 32
    return {4: 8, 2: 16, 1: 32}.get(jnp.dtype(dtype).itemsize, 8)


def _vmem_cap_bytes() -> int:
    try:
        cap = int(pltpu.get_tpu_info().vmem_capacity_bytes)
    except Exception:
        cap = 128 << 20
    return int(0.75 * cap)


# --------------------------------------------------------------------------- #
# kernels
# --------------------------------------------------------------------------- #
def _linear_relu_fused_kernel(x_ref, w_ref, b_ref, o_ref):
    """Single-K-block path (gk == 1): dot + bias + relu straight to the output.

    x_ref: (tm, tk)  activations
    w_ref: (tn, tk)  weights in PyTorch (out, in) layout -> contract last dims
    b_ref: (1,  tn)  bias (f32)
    o_ref: (tm, tn)  output
    """
    y = lax.dot_general(
        x_ref[...], w_ref[...],
        dimension_numbers=(((1,), (1,)), ((), ())),
        preferred_element_type=jnp.float32,
    )
    o_ref[...] = jnp.maximum(y + b_ref[...], 0.0).astype(o_ref.dtype)


def _linear_relu_acc_kernel(x_ref, w_ref, b_ref, o_ref, acc_ref):
    """Multi-K-block path: f32 accumulator resident across the K axis.

    Accumulator is initialized with the broadcast bias at k == 0, so the
    epilogue is just relu + cast.
    """
    k = pl.program_id(2)

    @pl.when(k == 0)
    def _():
        acc_ref[...] = jnp.broadcast_to(b_ref[...], acc_ref.shape)

    acc_ref[...] += lax.dot_general(
        x_ref[...], w_ref[...],
        dimension_numbers=(((1,), (1,)), ((), ())),
        preferred_element_type=jnp.float32,
    )

    @pl.when(k == pl.num_programs(2) - 1)
    def _():
        o_ref[...] = jnp.maximum(acc_ref[...], 0.0).astype(o_ref.dtype)


# --------------------------------------------------------------------------- #
# parameter preparation (one-time: pad + cast the weight matrix)
# --------------------------------------------------------------------------- #
class ContextEmbeddingParams:
    """Holds the (padded, possibly bf16) weight & bias plus static tiling info."""

    def __init__(self, weight_padded, bias_padded, n, k, tn, tk):
        self.weight_padded = weight_padded   # (N_pad, K_pad) compute dtype
        self.bias_padded = bias_padded       # (1, N_pad) f32
        self.n = n
        self.k = k
        self.tn = tn
        self.tk = tk


def prepare_context_embedding_params(weight, bias, *, compute_dtype=None,
                                     tn=None, tk=None):
    """Pad/cast nn.Linear params once.  weight: (N, K) PyTorch layout."""
    N, K = weight.shape
    if compute_dtype is not None:
        weight = weight.astype(compute_dtype)

    # tn: lane-dense, minimize N over-padding (prefer the larger tile on ties).
    if tn is None:
        tn = min((512, 384, 256, 128), key=lambda t: (_round_up(N, t) - N, -t))
    else:
        tn = _round_up(tn, 128)

    # tk: whole K in one block up to 1024 (fused path); tile at 1024 beyond.
    if tk is None:
        tk = min(_round_up(K, 128), 1024)
    else:
        tk = _round_up(tk, 128)

    N_pad = _round_up(N, tn)
    K_pad = _round_up(K, tk)

    if (N_pad, K_pad) != (N, K):
        wp = jnp.zeros((N_pad, K_pad), weight.dtype).at[:N, :K].set(weight)
    else:
        wp = weight
    bp = jnp.zeros((1, N_pad), jnp.float32).at[0, :N].set(bias.astype(jnp.float32))
    return ContextEmbeddingParams(wp, bp, N, K, tn, tk)


# --------------------------------------------------------------------------- #
# forward
# --------------------------------------------------------------------------- #
@functools.partial(jax.jit, static_argnames=("n", "k_dim", "tn", "tk", "tm"))
def _forward_impl(x, wp, bp, *, n, k_dim, tn, tk, tm):
    B, K = x.shape
    assert K == k_dim, "context_dim mismatch"
    N_pad, K_pad = wp.shape
    out_dtype = x.dtype
    compute_dtype = wp.dtype

    # tm: sublane-packed for the compute dtype, large enough that gi == 1 for
    # realistic batch sizes (single HBM pass over the weight matrix).
    sub = _sublane_multiple(compute_dtype)
    tm = min(_round_up(B, sub), 1024) if tm is None else _round_up(tm, sub)
    M_pad = _round_up(B, tm)

    # Per-call x handling only (weights already padded/cast at prepare time).
    if x.dtype != compute_dtype:
        x = x.astype(compute_dtype)
    if (M_pad, K_pad) != (B, K):
        xp = jnp.zeros((M_pad, K_pad), x.dtype).at[:B, :K].set(x)
    else:
        xp = x

    gi, gj, gk = M_pad // tm, N_pad // tn, K_pad // tk

    # VMEM budget: double-buffered in/out tiles (+ accumulator on the gk>1 path),
    # clamped generation-aware to 0.75 * physical VMEM.
    in_b = jnp.dtype(compute_dtype).itemsize
    out_b = jnp.dtype(out_dtype).itemsize
    tile_bytes = 2 * (tm * tk + tn * tk) * in_b + 2 * tm * tn * out_b + 2 * tn * 4
    if gk > 1:
        tile_bytes += tm * tn * 4
    vmem_limit = max(min(tile_bytes + (4 << 20), _vmem_cap_bytes()), 16 << 20)

    if gk == 1:
        # Fused path: no accumulator scratch, 2-D grid (j first -> megacore
        # shards over N, each v7x core streams a disjoint slice of W).
        out_padded = pl.pallas_call(
            _linear_relu_fused_kernel,
            out_shape=jax.ShapeDtypeStruct((M_pad, N_pad), out_dtype),
            grid_spec=pltpu.PrefetchScalarGridSpec(
                num_scalar_prefetch=0,
                grid=(gj, gi),
                in_specs=[
                    pl.BlockSpec((tm, tk), lambda j, i: (i, 0)),   # x tile
                    pl.BlockSpec((tn, tk), lambda j, i: (j, 0)),   # W tile (N,K)
                    pl.BlockSpec((1, tn), lambda j, i: (0, j)),    # bias tile
                ],
                out_specs=pl.BlockSpec((tm, tn), lambda j, i: (i, j)),
            ),
            compiler_params=pltpu.CompilerParams(
                dimension_semantics=("parallel", "parallel"),
                vmem_limit_bytes=int(vmem_limit),
            ),
        )(xp, wp, bp)
    else:
        out_padded = pl.pallas_call(
            _linear_relu_acc_kernel,
            out_shape=jax.ShapeDtypeStruct((M_pad, N_pad), out_dtype),
            grid_spec=pltpu.PrefetchScalarGridSpec(
                num_scalar_prefetch=0,
                grid=(gj, gi, gk),
                in_specs=[
                    pl.BlockSpec((tm, tk), lambda j, i, kk: (i, kk)),
                    pl.BlockSpec((tn, tk), lambda j, i, kk: (j, kk)),
                    pl.BlockSpec((1, tn), lambda j, i, kk: (0, j)),
                ],
                out_specs=pl.BlockSpec((tm, tn), lambda j, i, kk: (i, j)),
                scratch_shapes=[pltpu.VMEM((tm, tn), jnp.float32)],
            ),
            compiler_params=pltpu.CompilerParams(
                dimension_semantics=("parallel", "parallel", "arbitrary"),
                vmem_limit_bytes=int(vmem_limit),
            ),
        )(xp, wp, bp)

    if (M_pad, N_pad) != (B, n):
        return out_padded[:B, :n]
    return out_padded


def context_embedding_forward(x, params: ContextEmbeddingParams, *, tm=None):
    """relu(x @ W^T + b) using pre-padded params.  x: (B, context_dim)."""
    return _forward_impl(
        x, params.weight_padded, params.bias_padded,
        n=params.n, k_dim=params.k, tn=params.tn, tk=params.tk, tm=tm,
    )


# --------------------------------------------------------------------------- #
# init (nn.Linear default: U(-1/sqrt(fan_in), 1/sqrt(fan_in)))
# --------------------------------------------------------------------------- #
def init_context_embedding_params(key, context_dim, embedding_dim,
                                  dtype=jnp.float32):
    kw, kb = jax.random.split(key)
    bound = 1.0 / (context_dim ** 0.5)
    weight = jax.random.uniform(
        kw, (embedding_dim, context_dim), dtype=dtype, minval=-bound, maxval=bound)
    bias = jax.random.uniform(
        kb, (embedding_dim,), dtype=dtype, minval=-bound, maxval=bound)
    return weight, bias


if __name__ == "__main__":
    key = jax.random.PRNGKey(0)
    k_x, k_p = jax.random.split(key)

    batch = 8
    context_dim = 32
    embedding_dim = 64

    x = jax.random.normal(k_x, (batch, context_dim), dtype=jnp.float32)
    weight, bias = init_context_embedding_params(k_p, context_dim, embedding_dim)

    # Pure-JAX reference.
    y_ref = jnp.maximum(x @ weight.T + bias, 0.0)

    # f32 path (tight check).
    params_f32 = prepare_context_embedding_params(weight, bias)
    y = jax.block_until_ready(context_embedding_forward(x, params_f32))
    assert y.shape == (batch, embedding_dim)
    assert jnp.allclose(y, y_ref, atol=1e-5, rtol=1e-5), "f32 mismatch vs reference"

    # bf16-weight path (halves weight HBM traffic on v5e/v6e/v7x; loose check).
    params_bf16 = prepare_context_embedding_params(
        weight, bias, compute_dtype=jnp.bfloat16)
    y_bf16 = jax.block_until_ready(context_embedding_forward(x, params_bf16))
    assert y_bf16.shape == (batch, embedding_dim)
    assert jnp.allclose(y_bf16, y_ref, atol=5e-2, rtol=5e-2), "bf16 mismatch vs reference"

    print("KERNEL_OK")
</pallas_src>

<mosaic_0001>
module attributes {stable_mosaic.version = 11 : i64} {
  func.func @_linear_relu_fused_kernel(%arg0: i32, %arg1: i32, %arg2: memref<8x128xf32, #tpu.memory_space<vmem>>, %arg3: memref<128x128xf32, #tpu.memory_space<vmem>>, %arg4: memref<1x128xf32, #tpu.memory_space<vmem>>, %arg5: memref<8x128xf32, #tpu.memory_space<vmem>>) attributes {dimension_semantics = [#tpu.dimension_semantics<parallel>, #tpu.dimension_semantics<parallel>], iteration_bounds = array<i64: 1, 1>, scalar_prefetch = 0 : i64, scratch_operands = 0 : i64, tpu.core_type = #tpu.core_type<tc>, window_params = [{transform_indices = @transform_0, window_bounds = array<i64: 8, 128>}, {transform_indices = @transform_1, window_bounds = array<i64: 128, 128>}, {transform_indices = @transform_2, window_bounds = array<i64: 1, 128>}, {transform_indices = @transform_3, window_bounds = array<i64: 8, 128>}]} {
    %c0 = arith.constant 0 : index
    %c0_0 = arith.constant 0 : index
    %0 = vector.load %arg2[%c0, %c0_0] : memref<8x128xf32, #tpu.memory_space<vmem>>, vector<8x128xf32>
    %c0_1 = arith.constant 0 : index
    %c0_2 = arith.constant 0 : index
    %1 = vector.load %arg3[%c0_1, %c0_2] : memref<128x128xf32, #tpu.memory_space<vmem>>, vector<128x128xf32>
    %cst = arith.constant dense<0.000000e+00> : vector<8x128xf32>
    %2 = tpu.matmul %0, %1, %cst {dimension_numbers = #tpu.dot_dimension_numbers<[1], [1], [0], [0], [0, 0, 1, 0], [], []>} : vector<8x128xf32>, vector<128x128xf32>, vector<8x128xf32> -> vector<8x128xf32>
    %c0_3 = arith.constant 0 : index
    %c0_4 = arith.constant 0 : index
    %3 = vector.load %arg4[%c0_3, %c0_4] : memref<1x128xf32, #tpu.memory_space<vmem>>, vector<1x128xf32>
    %4 = vector.broadcast %3 : vector<1x128xf32> to vector<8x128xf32>
    %5 = arith.addf %2, %4 : vector<8x128xf32>
    %cst_5 = arith.constant 0.000000e+00 : f32
    %6 = vector.broadcast %cst_5 : f32 to vector<8x128xf32>
    %7 = arith.maximumf %5, %6 : vector<8x128xf32>
    %c0_6 = arith.constant 0 : index
    %c0_7 = arith.constant 0 : index
    %8 = vector.load %arg5[%c0_6, %c0_7] : memref<8x128xf32, #tpu.memory_space<vmem>>, vector<8x128xf32>
    tpu.vector_store %arg5[%c0_6, %c0_7], %7 {strides = array<i32>} : memref<8x128xf32, #tpu.memory_space<vmem>>, vector<8x128xf32>,
    return
  }
  func.func @transform_0(%arg0: i32, %arg1: i32) -> (i32, i32) {
    %c0_i32 = arith.constant 0 : i32
    %c0_i32_0 = arith.constant 0 : i32
    return %arg1, %c0_i32 : i32, i32
  }
  func.func @transform_1(%arg0: i32, %arg1: i32) -> (i32, i32) {
    %c0_i32 = arith.constant 0 : i32
    %c0_i32_0 = arith.constant 0 : i32
    return %arg0, %c0_i32 : i32, i32
  }
  func.func @transform_2(%arg0: i32, %arg1: i32) -> (i32, i32) {
    %c0_i32 = arith.constant 0 : i32
    %c0_i32_0 = arith.constant 0 : i32
    return %c0_i32, %arg0 : i32, i32
  }
  func.func @transform_3(%arg0: i32, %arg1: i32) -> (i32, i32) {
    %c0_i32 = arith.constant 0 : i32
    return %arg1, %arg0 : i32, i32
  }
}

</mosaic_0001>

<llo_original>
// kernel: _forward_impl.1
$region0: #{_forward_impl.1}
  #allocation0 [shape = 'u32[]', space=smem, size = 0x4, offset = 0x4, fixed_abs, tag = 'smem constant byte address 0x4 - core index']
  #allocation1 [shape = 'u32[72,128]{1,0:T(1,128)}', space=vmem, size = 0x9000, scoped, tag = 'internal scratch']
  %s0 = inlined_call_operand.vmem [shape: f32[8,128], index: 0, kind: input, shape index: {}]
  %s1 = inlined_call_operand.hbm [shape: f32[128,128], index: 1, kind: input, shape index: {}]
  %s2 = inlined_call_operand.vmem [shape: f32[1,128], index: 2, kind: input, shape index: {}]
  %s3 = inlined_call_operand.hbm [shape: f32[8,128], index: 3, kind: output, shape index: {}]
  %s4 = sld [smem:[#allocation0]]
  $region26: #{_forward_impl.1} parent=0
    _
  %s6 = ssub.s32 1, %s4
  %s7 = scalar_select 0, %s6, %s4
  $region1: #{_forward_impl.1} parent=0
    #allocation2 [shape = 'u8[65536]{0}', space=vmem, size = 0x10000, scoped, tag = 'input window, operand 1, single buffered']
    #allocation3 [shape = 's32[1]{0}', space=sflag, size = 0x4, scoped, tag = 'scoped memory for _forward_impl.1']
    #allocation4 [shape = 's32[1]{0}', space=sflag, size = 0x4, scoped, tag = 'scoped memory for _forward_impl.1']
    #allocation5 [shape = 'u8[4096]{0}', space=vmem, size = 0x1000, scoped, tag = 'output window, operand 0, single buffered']
    %8 = vsyncpa [#allocation3], 0
    %9 = vsyncpa [#allocation4], 0
    // Predicated region
    $region2: #{_forward_impl.1} parent=1 // pred_check
      _
    $region3: #{_forward_impl.1} parent=1 // pred_check_branch
      %11 = sbr.rel (0) target = $region5
    $region4: #{_forward_impl.1} parent=1 // pred_region
      _
    $region5: #{_forward_impl.1} parent=1 // pred_fallthru
      _
    // Predicated region
    $region6: #{_forward_impl.1} parent=1 // pred_check
      _
    $region7: #{_forward_impl.1} parent=1 // pred_check_branch
      %13 = sbr.rel (0) target = $region9
    $region8: #{_forward_impl.1} parent=1 // pred_region
      %15 = vsyncadd [#allocation3], 0
      %s16 = sshll.u32 %s1, 4
      %s17 = int_to_ptr.hbm [resolvable:$true] %s16
      %s18 = sshll.u32 [#allocation2], 4
      %s19 = int_to_ptr.vmem [resolvable:$true] %s18
      %24 = dma.hbm_to_vmem [thread:$0]  %s17, 2048, %s19, [#allocation3], 128, 128, 8
    $region9: #{_forward_impl.1} parent=1 // pred_fallthru
      _
    // Predicated region
    $region10: #{_forward_impl.1} parent=1 // pred_check
      _
    $region11: #{_forward_impl.1} parent=1 // pred_check_branch
      %26 = sbr.rel (0) target = $region13
    $region12: #{_forward_impl.1} parent=1 // pred_region
      _
    $region13: #{_forward_impl.1} parent=1 // pred_fallthru
      _
    // Predicated region
    $region14: #{_forward_impl.1} parent=1 // pred_check
      _
    $region15: #{_forward_impl.1} parent=1 // pred_check_branch
      %28 = sbr.rel (0) target = $region17
    $region16: #{_forward_impl.1} parent=1 // pred_region
      %30 = dma.done [#allocation3], 2048
    $region17: #{_forward_impl.1} parent=1 // pred_fallthru
      _
    %v31 = vld [vmem:[%s0] sm:$0xff]
    %v32 = vld [vmem:[#allocation2] sm:$0xff]
    %v33 = vld [vmem:[#allocation2 + $0x8] sm:$0xff]
    %v34 = vld [vmem:[#allocation2 + $0x10] sm:$0xff]
    %v35 = vld [vmem:[#allocation2 + $0x18] sm:$0xff]
    %v36 = vld [vmem:[#allocation2 + $0x20] sm:$0xff]
    %v37 = vld [vmem:[#allocation2 + $0x28] sm:$0xff]
    %v38 = vld [vmem:[#allocation2 + $0x30] sm:$0xff]
    %v39 = vld [vmem:[#allocation2 + $0x38] sm:$0xff]
    %v40 = vld [vmem:[#allocation2 + $0x40] sm:$0xff]
    %v41 = vld [vmem:[#allocation2 + $0x48] sm:$0xff]
    %v42 = vld [vmem:[#allocation2 + $0x50] sm:$0xff]
    %v43 = vld [vmem:[#allocation2 + $0x58] sm:$0xff]
    %v44 = vld [vmem:[#allocation2 + $0x60] sm:$0xff]
    %v45 = vld [vmem:[#allocation2 + $0x68] sm:$0xff]
    %v46 = vld [vmem:[#allocation2 + $0x70] sm:$0xff]
    %v47 = vld [vmem:[#allocation2 + $0x78] sm:$0xff]
    %v48 = vld [vmem:[%s2] sm:$0x1]
    %v50 = vperm.slane %v48, 0
    %52 = vmatpush.xpose.msra.mxu0 %v47
    %53 = vmatpush.xpose.msra.mxu0 %v46
    %54 = vmatpush.xpose.msra.mxu0 %v45
    %55 = vmatpush.xpose.msra.mxu0 %v44
    %56 = vmatpush.xpose.msra.mxu0 %v43
    %57 = vmatpush.xpose.msra.mxu0 %v42
    %58 = vmatpush.xpose.msra.mxu0 %v41
    %59 = vmatpush.xpose.msra.mxu0 %v40
    %60 = vmatpush.xpose.msra.mxu0 %v39
    %61 = vmatpush.xpose.msra.mxu0 %v38
    %62 = vmatpush.xpose.msra.mxu0 %v37
    %63 = vmatpush.xpose.msra.mxu0 %v36
    %64 = vmatpush.xpose.msra.mxu0 %v35
    %65 = vmatpush.xpose.msra.mxu0 %v34
    %66 = vmatpush.xpose.msra.mxu0 %v33
    %67 = vmatpush.xpose.msra.mxu0 %v32
    %68 = vmatmul.f32.gmra.mxu0 %v31
    %v69 = vpop.f32.mrf.mxu0
    %v70 = vadd.f32 %v50, %v69
    %71 = vdwg.mxu0
    %v72 = vmax.f32 %v70, 0.0
    %73 = vst [vmem:[#allocation5] sm:$0xff] %v72
    // Predicated region
    $region18: #{_forward_impl.1} parent=1 // pred_check
      _
    $region19: #{_forward_impl.1} parent=1 // pred_check_branch
      %75 = sbr.rel (0) target = $region21
    $region20: #{_forward_impl.1} parent=1 // pred_region
      %77 = vsyncadd [#allocation4], 0
      %s79 = sshll.u32 [#allocation5], 4
      %s80 = int_to_ptr.vmem [resolvable:$true] %s79
      %s81 = sshll.u32 %s3, 4
      %s82 = int_to_ptr.hbm [resolvable:$true] %s81
      %84 = dma.vmem_to_hbm [thread:$0]  %s80, 128, %s82, [#allocation4]
    $region21: #{_forward_impl.1} parent=1 // pred_fallthru
      _
    // Predicated region
    $region22: #{_forward_impl.1} parent=1 // pred_check
      _
    $region23: #{_forward_impl.1} parent=1 // pred_check_branch
      %86 = sbr.rel (0) target = $region25
    $region24: #{_forward_impl.1} parent=1 // pred_region
      %88 = dma.done [#allocation4], 128
    $region25: #{_forward_impl.1} parent=1 // pred_fallthru
      _
    %89 = vsyncpa [#allocation3], 1
    %90 = vsyncpa [#allocation4], 1

</llo_original>
